<compile_context>
chip_gen: v6e
topology: v6e:2x2x1
jax: 0.10.0
libtpu: 0.0.40
codegen_flags: <defaults>
</compile_context>

<pallas_src>
import functools
import math

import jax
import jax.numpy as jnp
from jax import lax
from jax.experimental import pallas as pl
from jax.experimental.pallas import tpu as pltpu


def _round_up(x, m):
    return ((x + m - 1) // m) * m


def _vmem_limit(est_bytes):
    # Explicit scoped-VMEM cap: >= 32 MiB, <= 64 MiB (fits v7x's smaller VMEM).
    return int(min(64 * 2 ** 20, max(32 * 2 ** 20, 4 * est_bytes)))


# ---------------------------------------------------------------------------
# Kernels
# ---------------------------------------------------------------------------
def _stats_kernel(z_ref, w_ref, b_ref, s_ref,
                  g_ref, a_ref, sphi_ref, ss_ref,
                  *, scale, tile_n, n_true, need_mask):
    """Streaming accumulation of raw RFF statistics over row tiles of (z, s)."""
    i = pl.program_id(0)

    @pl.when(i == 0)
    def _():
        g_ref[...] = jnp.zeros_like(g_ref)
        a_ref[...] = jnp.zeros_like(a_ref)
        sphi_ref[...] = jnp.zeros_like(sphi_ref)
        ss_ref[...] = jnp.zeros_like(ss_ref)

    zw = jnp.dot(z_ref[...], w_ref[...], preferred_element_type=jnp.float32)
    phi = scale * jnp.cos(zw + b_ref[...])          # (tile_n, d_pad)
    if need_mask:                                   # zero rows past true batch
        row = lax.broadcasted_iota(jnp.int32, (tile_n, 1), 0)
        phi = phi * ((row + i * tile_n) < n_true).astype(jnp.float32)

    s = s_ref[...]                                  # zero-padded rows/cols
    g_ref[...] += lax.dot_general(phi, phi, (((0,), (0,)), ((), ())),
                                  preferred_element_type=jnp.float32)
    a_ref[...] += lax.dot_general(phi, s, (((0,), (0,)), ((), ())),
                                  preferred_element_type=jnp.float32)
    sphi_ref[...] += jnp.sum(phi, axis=0, keepdims=True)
    ss_ref[...] += jnp.sum(s, axis=0, keepdims=True)


def _phi_sum_kernel(z_ref, w_ref, b_ref, sphi_ref,
                    *, scale, tile_n, n_true, need_mask):
    """Inference helper: only sum_rows(phi) is needed to recompute mu."""
    i = pl.program_id(0)

    @pl.when(i == 0)
    def _():
        sphi_ref[...] = jnp.zeros_like(sphi_ref)

    zw = jnp.dot(z_ref[...], w_ref[...], preferred_element_type=jnp.float32)
    phi = scale * jnp.cos(zw + b_ref[...])
    if need_mask:
        row = lax.broadcasted_iota(jnp.int32, (tile_n, 1), 0)
        phi = phi * ((row + i * tile_n) < n_true).astype(jnp.float32)
    sphi_ref[...] += jnp.sum(phi, axis=0, keepdims=True)


def _predict_kernel(z_ref, w_ref, b_ref, t_ref, off_ref, out_ref, *, scale):
    """Recompute phi for this row tile; s_hat = phi @ target + offset.

    offset = s_m - mu @ target is precomputed once outside the kernel, so the
    mean-centering costs one (1, s_dim) add per tile instead of a full
    (tile_n, d_pad) subtract.
    """
    zw = jnp.dot(z_ref[...], w_ref[...], preferred_element_type=jnp.float32)
    phi = scale * jnp.cos(zw + b_ref[...])
    out_ref[...] = (jnp.dot(phi, t_ref[...], preferred_element_type=jnp.float32)
                    + off_ref[...])


# ---------------------------------------------------------------------------
# Module wrapper
# ---------------------------------------------------------------------------
class ClosedFormAdvPallas:
    """Pallas/TPU implementation of ClosedFormAdv with an RFF kernel."""

    def __init__(self, lam, rff_dim, z_dim, s_dim, key, tile_n=512):
        self.lam = float(lam)
        self.rff_dim = int(rff_dim)
        self.z_dim = int(z_dim)
        self.s_dim = int(s_dim)
        self.d_pad = _round_up(self.rff_dim, 128)
        self.ds_pad = _round_up(self.s_dim, 128)
        self.tile_n_pref = int(tile_n)
        self.scale = math.sqrt(2.0 / self.rff_dim)

        kw, kb = jax.random.split(key)
        # Deterministic synthetic RFF parameters (w ~ N(0,1), b ~ U(0, 2*pi)).
        self.w = jax.random.normal(kw, (self.rff_dim, self.z_dim), dtype=jnp.float32)
        self.b = (jax.random.uniform(kb, (self.rff_dim,), dtype=jnp.float32)
                  * (2.0 * math.pi)).reshape(1, self.rff_dim)

        # Lane-padded, pre-transposed copies used by the kernels.  Padded RFF
        # columns have w = 0 and b = 0; since the padded target rows are kept
        # at zero, their contribution to the prediction is exactly zero.
        self.w_t = (jnp.zeros((self.z_dim, self.d_pad), jnp.float32)
                    .at[:, :self.rff_dim].set(self.w.T))
        self.b_pad = (jnp.zeros((1, self.d_pad), jnp.float32)
                      .at[:, :self.rff_dim].set(self.b))

        # Parameter(torch.zeros(rff_dim, s_dim), requires_grad=False)
        self.target_closed = jnp.zeros((self.rff_dim, self.s_dim), jnp.float32)
        self.s_m = jnp.zeros((1, self.s_dim), jnp.float32)
        self._target_pad = jnp.zeros((self.d_pad, self.ds_pad), jnp.float32)
        self._sm_pad = jnp.zeros((1, self.ds_pad), jnp.float32)

    # -- tiling ---------------------------------------------------------------
    def _tiling(self, n):
        tile_n = min(self.tile_n_pref, _round_up(n, 8))
        n_pad = _round_up(n, tile_n)
        return tile_n, n_pad

    # -- Pallas-backed pieces -------------------------------------------------
    def _stats(self, z_p, s_p, tile_n, n_true):
        n_pad, z_dim = z_p.shape
        d_pad, ds_pad = self.d_pad, self.ds_pad
        kern = functools.partial(_stats_kernel, scale=self.scale, tile_n=tile_n,
                                 n_true=n_true, need_mask=(n_pad != n_true))
        est = 4 * (2 * tile_n * (z_dim + ds_pad) + z_dim * d_pad + d_pad
                   + 2 * (d_pad * d_pad + d_pad * ds_pad + d_pad + ds_pad))
        return pl.pallas_call(
            kern,
            out_shape=(jax.ShapeDtypeStruct((d_pad, d_pad), jnp.float32),
                       jax.ShapeDtypeStruct((d_pad, ds_pad), jnp.float32),
                       jax.ShapeDtypeStruct((1, d_pad), jnp.float32),
                       jax.ShapeDtypeStruct((1, ds_pad), jnp.float32)),
            grid_spec=pltpu.PrefetchScalarGridSpec(
                num_scalar_prefetch=0, grid=(n_pad // tile_n,),
                in_specs=[pl.BlockSpec((tile_n, z_dim), lambda i: (i, 0)),
                          pl.BlockSpec((z_dim, d_pad), lambda i: (0, 0)),
                          pl.BlockSpec((1, d_pad), lambda i: (0, 0)),
                          pl.BlockSpec((tile_n, ds_pad), lambda i: (i, 0))],
                out_specs=(pl.BlockSpec((d_pad, d_pad), lambda i: (0, 0)),
                           pl.BlockSpec((d_pad, ds_pad), lambda i: (0, 0)),
                           pl.BlockSpec((1, d_pad), lambda i: (0, 0)),
                           pl.BlockSpec((1, ds_pad), lambda i: (0, 0)))),
            compiler_params=pltpu.CompilerParams(
                dimension_semantics=("arbitrary",),
                vmem_limit_bytes=_vmem_limit(est)),
        )(z_p, self.w_t, self.b_pad, s_p)

    def _phi_sum(self, z_p, tile_n, n_true):
        n_pad, z_dim = z_p.shape
        d_pad = self.d_pad
        kern = functools.partial(_phi_sum_kernel, scale=self.scale, tile_n=tile_n,
                                 n_true=n_true, need_mask=(n_pad != n_true))
        est = 4 * (2 * tile_n * z_dim + z_dim * d_pad + 3 * d_pad)
        return pl.pallas_call(
            kern,
            out_shape=jax.ShapeDtypeStruct((1, d_pad), jnp.float32),
            grid_spec=pltpu.PrefetchScalarGridSpec(
                num_scalar_prefetch=0, grid=(n_pad // tile_n,),
                in_specs=[pl.BlockSpec((tile_n, z_dim), lambda i: (i, 0)),
                          pl.BlockSpec((z_dim, d_pad), lambda i: (0, 0)),
                          pl.BlockSpec((1, d_pad), lambda i: (0, 0))],
                out_specs=pl.BlockSpec((1, d_pad), lambda i: (0, 0))),
            compiler_params=pltpu.CompilerParams(
                dimension_semantics=("arbitrary",),
                vmem_limit_bytes=_vmem_limit(est)),
        )(z_p, self.w_t, self.b_pad)

    def _predict(self, z_p, offset_pad, tile_n):
        n_pad, z_dim = z_p.shape
        d_pad, ds_pad = self.d_pad, self.ds_pad
        est = 4 * (2 * tile_n * (z_dim + ds_pad) + z_dim * d_pad + d_pad
                   + d_pad * ds_pad + ds_pad)
        return pl.pallas_call(
            functools.partial(_predict_kernel, scale=self.scale),
            out_shape=jax.ShapeDtypeStruct((n_pad, ds_pad), jnp.float32),
            grid_spec=pltpu.PrefetchScalarGridSpec(
                num_scalar_prefetch=0, grid=(n_pad // tile_n,),
                in_specs=[pl.BlockSpec((tile_n, z_dim), lambda i: (i, 0)),
                          pl.BlockSpec((z_dim, d_pad), lambda i: (0, 0)),
                          pl.BlockSpec((1, d_pad), lambda i: (0, 0)),
                          pl.BlockSpec((d_pad, ds_pad), lambda i: (0, 0)),
                          pl.BlockSpec((1, ds_pad), lambda i: (0, 0))],
                out_specs=pl.BlockSpec((tile_n, ds_pad), lambda i: (i, 0))),
            compiler_params=pltpu.CompilerParams(
                dimension_semantics=("parallel",),
                vmem_limit_bytes=_vmem_limit(est)),
        )(z_p, self.w_t, self.b_pad, self._target_pad, offset_pad)

    # -- forward --------------------------------------------------------------
    def forward(self, z, s=None):
        n = z.shape[0]
        d, ds = self.rff_dim, self.s_dim
        tile_n, n_pad = self._tiling(n)
        z_p = jnp.pad(z.astype(jnp.float32), ((0, n_pad - n), (0, 0)))

        if s is not None:
            s_p = jnp.pad(s.astype(jnp.float32),
                          ((0, n_pad - n), (0, self.ds_pad - ds)))
            g_raw, a_raw, sphi, ss = self._stats(z_p, s_p, tile_n, n)
            mu_pad = sphi / n                           # (1, d_pad)
            sm_pad = ss / n                             # (1, ds_pad)
            mu = mu_pad[:, :d]
            s_m = sm_pad[:, :ds]
            # Centered statistics:  phi_c^T phi_c = phi^T phi - N mu^T mu
            g_c = (g_raw[:d, :d] - n * (mu.T @ mu)
                   + self.lam * jnp.eye(d, dtype=jnp.float32))
            a_c = a_raw[:d, :ds] - n * (mu.T @ s_m)
            # TODO(synk): dense (d x d) matrix inverse has no clean Pallas
            # equivalent; kept in plain JAX (matches torch.linalg.inv).
            target = jnp.linalg.inv(g_c) @ a_c
            self.target_closed = target
            self.s_m = s_m
            self._target_pad = (jnp.zeros((self.d_pad, self.ds_pad), jnp.float32)
                                .at[:d, :ds].set(target))
            self._sm_pad = (jnp.zeros((1, self.ds_pad), jnp.float32)
                            .at[:, :ds].set(s_m))
        else:
            sphi = self._phi_sum(z_p, tile_n, n)
            mu_pad = sphi / n

        # Fold mean-centering into a single offset:  s_hat = phi@T + (s_m - mu@T)
        offset_pad = self._sm_pad - mu_pad @ self._target_pad
        s_hat_pad = self._predict(z_p, offset_pad, tile_n)  # lane-dense padded out
        return s_hat_pad[:n, :ds]

    __call__ = forward


# ---------------------------------------------------------------------------
# Pure-JAX reference for verification
# ---------------------------------------------------------------------------
def _ref_forward(z, s, w, b, lam):
    phi = jnp.sqrt(2.0 / w.shape[0]) * jnp.cos(z @ w.T + b)
    phi = phi - phi.mean(axis=0, keepdims=True)
    s_m = s.mean(axis=0, keepdims=True)
    g = phi.T @ phi + lam * jnp.eye(phi.shape[1], dtype=jnp.float32)
    target = jnp.linalg.inv(g) @ (phi.T @ (s - s_m))
    return phi @ target + s_m, target, s_m


if __name__ == "__main__":
    batch, z_dim, rff_dim, s_dim = 8, 32, 64, 4
    lam = 0.1

    key = jax.random.PRNGKey(0)
    k_mod, k_z, k_s, k_z2, k_s2 = jax.random.split(key, 5)

    module = ClosedFormAdvPallas(lam, rff_dim, z_dim, s_dim, k_mod)

    z = jax.random.normal(k_z, (batch, z_dim), dtype=jnp.float32)
    s = jax.random.normal(k_s, (batch, s_dim), dtype=jnp.float32)

    # Training branch (s given): streaming stats -> closed-form target -> s_hat.
    s_hat = jax.block_until_ready(module(z, s))
    # Inference branch (s is None): stored target / s_m, fresh mean-centering.
    s_hat_inf = jax.block_until_ready(module(z, None))

    ref, ref_target, ref_sm = _ref_forward(z, s, module.w, module.b, lam)
    assert jnp.allclose(s_hat, ref, atol=1e-4, rtol=1e-4), "train branch mismatch"
    assert jnp.allclose(module.target_closed, ref_target, atol=1e-4, rtol=1e-4)
    assert jnp.allclose(module.s_m, ref_sm, atol=1e-5, rtol=1e-5)
    assert jnp.allclose(s_hat_inf, ref, atol=1e-4, rtol=1e-4), "infer branch mismatch"

    # Ragged batch (exercises the row-mask path: n not a multiple of the tile).
    batch2 = 10
    z2 = jax.random.normal(k_z2, (batch2, z_dim), dtype=jnp.float32)
    s2 = jax.random.normal(k_s2, (batch2, s_dim), dtype=jnp.float32)
    s_hat2 = jax.block_until_ready(module(z2, s2))
    ref2, ref_target2, _ = _ref_forward(z2, s2, module.w, module.b, lam)
    assert jnp.allclose(s_hat2, ref2, atol=1e-4, rtol=1e-4), "masked batch mismatch"
    assert jnp.allclose(module.target_closed, ref_target2, atol=1e-4, rtol=1e-4)

    print("KERNEL_OK")
</pallas_src>

<mosaic_0001>
module attributes {stable_mosaic.version = 11 : i64} {
  func.func @_stats_kernel(%arg0: i32, %arg1: memref<8x32xf32, #tpu.memory_space<vmem>>, %arg2: memref<32x128xf32, #tpu.memory_space<vmem>>, %arg3: memref<1x128xf32, #tpu.memory_space<vmem>>, %arg4: memref<8x128xf32, #tpu.memory_space<vmem>>, %arg5: memref<128x128xf32, #tpu.memory_space<vmem>>, %arg6: memref<128x128xf32, #tpu.memory_space<vmem>>, %arg7: memref<1x128xf32, #tpu.memory_space<vmem>>, %arg8: memref<1x128xf32, #tpu.memory_space<vmem>>) attributes {dimension_semantics = [#tpu.dimension_semantics<arbitrary>], iteration_bounds = array<i64: 1>, scalar_prefetch = 0 : i64, scratch_operands = 0 : i64, tpu.core_type = #tpu.core_type<tc>, window_params = [{transform_indices = @transform_0, window_bounds = array<i64: 8, 32>}, {pipeline_mode = #tpu.pipeline_mode<synchronous>, transform_indices = @transform_1, window_bounds = array<i64: 32, 128>}, {pipeline_mode = #tpu.pipeline_mode<synchronous>, transform_indices = @transform_2, window_bounds = array<i64: 1, 128>}, {transform_indices = @transform_3, window_bounds = array<i64: 8, 128>}, {pipeline_mode = #tpu.pipeline_mode<synchronous>, transform_indices = @transform_4, window_bounds = array<i64: 128, 128>}, {pipeline_mode = #tpu.pipeline_mode<synchronous>, transform_indices = @transform_5, window_bounds = array<i64: 128, 128>}, {pipeline_mode = #tpu.pipeline_mode<synchronous>, transform_indices = @transform_6, window_bounds = array<i64: 1, 128>}, {pipeline_mode = #tpu.pipeline_mode<synchronous>, transform_indices = @transform_7, window_bounds = array<i64: 1, 128>}]} {
    %c0_i32 = arith.constant 0 : i32
    %0 = arith.cmpi eq, %arg0, %c0_i32 : i32
    %1 = arith.extui %0 : i1 to i32
    %c0_i32_0 = arith.constant 0 : i32
    %2 = arith.cmpi ne, %1, %c0_i32_0 : i32
    scf.if %2 {
      %cst_29 = arith.constant 0.000000e+00 : f32
      %31 = vector.broadcast %cst_29 : f32 to vector<128x128xf32>
      %c0_30 = arith.constant 0 : index
      %c0_31 = arith.constant 0 : index
      %32 = vector.load %arg5[%c0_30, %c0_31] : memref<128x128xf32, #tpu.memory_space<vmem>>, vector<128x128xf32>
      tpu.vector_store %arg5[%c0_30, %c0_31], %31 {strides = array<i32>} : memref<128x128xf32, #tpu.memory_space<vmem>>, vector<128x128xf32>,
      %cst_32 = arith.constant 0.000000e+00 : f32
      %33 = vector.broadcast %cst_32 : f32 to vector<128x128xf32>
      %c0_33 = arith.constant 0 : index
      %c0_34 = arith.constant 0 : index
      %34 = vector.load %arg6[%c0_33, %c0_34] : memref<128x128xf32, #tpu.memory_space<vmem>>, vector<128x128xf32>
      tpu.vector_store %arg6[%c0_33, %c0_34], %33 {strides = array<i32>} : memref<128x128xf32, #tpu.memory_space<vmem>>, vector<128x128xf32>,
      %cst_35 = arith.constant 0.000000e+00 : f32
      %35 = vector.broadcast %cst_35 : f32 to vector<1x128xf32>
      %c0_36 = arith.constant 0 : index
      %c0_37 = arith.constant 0 : index
      %36 = vector.load %arg7[%c0_36, %c0_37] : memref<1x128xf32, #tpu.memory_space<vmem>>, vector<1x128xf32>
      tpu.vector_store %arg7[%c0_36, %c0_37], %35 {strides = array<i32>} : memref<1x128xf32, #tpu.memory_space<vmem>>, vector<1x128xf32>,
      %cst_38 = arith.constant 0.000000e+00 : f32
      %37 = vector.broadcast %cst_38 : f32 to vector<1x128xf32>
      %c0_39 = arith.constant 0 : index
      %c0_40 = arith.constant 0 : index
      %38 = vector.load %arg8[%c0_39, %c0_40] : memref<1x128xf32, #tpu.memory_space<vmem>>, vector<1x128xf32>
      tpu.vector_store %arg8[%c0_39, %c0_40], %37 {strides = array<i32>} : memref<1x128xf32, #tpu.memory_space<vmem>>, vector<1x128xf32>,
    } else {
    }
    %c0 = arith.constant 0 : index
    %c0_1 = arith.constant 0 : index
    %3 = vector.load %arg1[%c0, %c0_1] : memref<8x32xf32, #tpu.memory_space<vmem>>, vector<8x32xf32>
    %c0_2 = arith.constant 0 : index
    %c0_3 = arith.constant 0 : index
    %4 = vector.load %arg2[%c0_2, %c0_3] : memref<32x128xf32, #tpu.memory_space<vmem>>, vector<32x128xf32>
    %cst = arith.constant dense<0.000000e+00> : vector<8x128xf32>
    %5 = tpu.matmul %3, %4, %cst {dimension_numbers = #tpu.dot_dimension_numbers<[1], [0], [0], [1], [0, 0, 1, 1], [], []>} : vector<8x32xf32>, vector<32x128xf32>, vector<8x128xf32> -> vector<8x128xf32>
    %c0_4 = arith.constant 0 : index
    %c0_5 = arith.constant 0 : index
    %6 = vector.load %arg3[%c0_4, %c0_5] : memref<1x128xf32, #tpu.memory_space<vmem>>, vector<1x128xf32>
    %7 = vector.broadcast %6 : vector<1x128xf32> to vector<8x128xf32>
    %8 = arith.addf %5, %7 : vector<8x128xf32>
    %9 = math.cos %8 : vector<8x128xf32>
    %cst_6 = arith.constant 0.176776692 : f32
    %10 = vector.broadcast %cst_6 : f32 to vector<8x128xf32>
    %11 = arith.mulf %10, %9 : vector<8x128xf32>
    %c0_7 = arith.constant 0 : index
    %c0_8 = arith.constant 0 : index
    %12 = vector.load %arg4[%c0_7, %c0_8] : memref<8x128xf32, #tpu.memory_space<vmem>>, vector<8x128xf32>
    %c0_9 = arith.constant 0 : index
    %c0_10 = arith.constant 0 : index
    %13 = vector.load %arg5[%c0_9, %c0_10] : memref<128x128xf32, #tpu.memory_space<vmem>>, vector<128x128xf32>
    %cst_11 = arith.constant dense<0.000000e+00> : vector<128x128xf32>
    %14 = tpu.matmul %11, %11, %cst_11 {dimension_numbers = #tpu.dot_dimension_numbers<[0], [0], [1], [1], [0, 1, 1, 1], [], []>} : vector<8x128xf32>, vector<8x128xf32>, vector<128x128xf32> -> vector<128x128xf32>
    %15 = arith.addf %13, %14 : vector<128x128xf32>
    %c0_12 = arith.constant 0 : index
    %c0_13 = arith.constant 0 : index
    %16 = vector.load %arg5[%c0_12, %c0_13] : memref<128x128xf32, #tpu.memory_space<vmem>>, vector<128x128xf32>
    tpu.vector_store %arg5[%c0_12, %c0_13], %15 {strides = array<i32>} : memref<128x128xf32, #tpu.memory_space<vmem>>, vector<128x128xf32>,
    %c0_14 = arith.constant 0 : index
    %c0_15 = arith.constant 0 : index
    %17 = vector.load %arg6[%c0_14, %c0_15] : memref<128x128xf32, #tpu.memory_space<vmem>>, vector<128x128xf32>
    %cst_16 = arith.constant dense<0.000000e+00> : vector<128x128xf32>
    %18 = tpu.matmul %11, %12, %cst_16 {dimension_numbers = #tpu.dot_dimension_numbers<[0], [0], [1], [1], [0, 1, 1, 1], [], []>} : vector<8x128xf32>, vector<8x128xf32>, vector<128x128xf32> -> vector<128x128xf32>
    %19 = arith.addf %17, %18 : vector<128x128xf32>
    %c0_17 = arith.constant 0 : index
    %c0_18 = arith.constant 0 : index
    %20 = vector.load %arg6[%c0_17, %c0_18] : memref<128x128xf32, #tpu.memory_space<vmem>>, vector<128x128xf32>
    tpu.vector_store %arg6[%c0_17, %c0_18], %19 {strides = array<i32>} : memref<128x128xf32, #tpu.memory_space<vmem>>, vector<128x128xf32>,
    %c0_19 = arith.constant 0 : index
    %c0_20 = arith.constant 0 : index
    %21 = vector.load %arg7[%c0_19, %c0_20] : memref<1x128xf32, #tpu.memory_space<vmem>>, vector<1x128xf32>
    %cst_21 = arith.constant dense<0.000000e+00> : vector<128xf32>
    %22 = vector.multi_reduction <add>, %11, %cst_21 [0] : vector<8x128xf32> to vector<128xf32>
    %23 = vector.shape_cast %22 : vector<128xf32> to vector<1x128xf32>
    %24 = arith.addf %21, %23 : vector<1x128xf32>
    %c0_22 = arith.constant 0 : index
    %c0_23 = arith.constant 0 : index
    %25 = vector.load %arg7[%c0_22, %c0_23] : memref<1x128xf32, #tpu.memory_space<vmem>>, vector<1x128xf32>
    tpu.vector_store %arg7[%c0_22, %c0_23], %24 {strides = array<i32>} : memref<1x128xf32, #tpu.memory_space<vmem>>, vector<1x128xf32>,
    %c0_24 = arith.constant 0 : index
    %c0_25 = arith.constant 0 : index
    %26 = vector.load %arg8[%c0_24, %c0_25] : memref<1x128xf32, #tpu.memory_space<vmem>>, vector<1x128xf32>
    %cst_26 = arith.constant dense<0.000000e+00> : vector<128xf32>
    %27 = vector.multi_reduction <add>, %12, %cst_26 [0] : vector<8x128xf32> to vector<128xf32>
    %28 = vector.shape_cast %27 : vector<128xf32> to vector<1x128xf32>
    %29 = arith.addf %26, %28 : vector<1x128xf32>
    %c0_27 = arith.constant 0 : index
    %c0_28 = arith.constant 0 : index
    %30 = vector.load %arg8[%c0_27, %c0_28] : memref<1x128xf32, #tpu.memory_space<vmem>>, vector<1x128xf32>
    tpu.vector_store %arg8[%c0_27, %c0_28], %29 {strides = array<i32>} : memref<1x128xf32, #tpu.memory_space<vmem>>, vector<1x128xf32>,
    return
  }
  func.func @transform_0(%arg0: i32) -> (i32, i32) {
    %c0_i32 = arith.constant 0 : i32
    %c0_i32_0 = arith.constant 0 : i32
    return %arg0, %c0_i32 : i32, i32
  }
  func.func @transform_1(%arg0: i32) -> (i32, i32) {
    %c0_i32 = arith.constant 0 : i32
    %c0_i32_0 = arith.constant 0 : i32
    %c0_i32_1 = arith.constant 0 : i32
    return %c0_i32, %c0_i32_0 : i32, i32
  }
  func.func @transform_2(%arg0: i32) -> (i32, i32) {
    %c0_i32 = arith.constant 0 : i32
    %c0_i32_0 = arith.constant 0 : i32
    %c0_i32_1 = arith.constant 0 : i32
    return %c0_i32, %c0_i32_0 : i32, i32
  }
  func.func @transform_3(%arg0: i32) -> (i32, i32) {
    %c0_i32 = arith.constant 0 : i32
    %c0_i32_0 = arith.constant 0 : i32
    return %arg0, %c0_i32 : i32, i32
  }
  func.func @transform_4(%arg0: i32) -> (i32, i32) {
    %c0_i32 = arith.constant 0 : i32
    %c0_i32_0 = arith.constant 0 : i32
    %c0_i32_1 = arith.constant 0 : i32
    return %c0_i32, %c0_i32_0 : i32, i32
  }
  func.func @transform_5(%arg0: i32) -> (i32, i32) {
    %c0_i32 = arith.constant 0 : i32
    %c0_i32_0 = arith.constant 0 : i32
    %c0_i32_1 = arith.constant 0 : i32
    return %c0_i32, %c0_i32_0 : i32, i32
  }
  func.func @transform_6(%arg0: i32) -> (i32, i32) {
    %c0_i32 = arith.constant 0 : i32
    %c0_i32_0 = arith.constant 0 : i32
    %c0_i32_1 = arith.constant 0 : i32
    return %c0_i32, %c0_i32_0 : i32, i32
  }
  func.func @transform_7(%arg0: i32) -> (i32, i32) {
    %c0_i32 = arith.constant 0 : i32
    %c0_i32_0 = arith.constant 0 : i32
    %c0_i32_1 = arith.constant 0 : i32
    return %c0_i32, %c0_i32_0 : i32, i32
  }
}

</mosaic_0001>

<llo_original>
// kernel: tpu_custom_call.1
$region0: #{tpu_custom_call.1}
  #allocation0 [shape = 'u32[]', space=smem, size = 0x4, offset = 0x4, fixed_abs, tag = 'smem constant byte address 0x4 - core index']
  #allocation1 [shape = 'u32[144,128]{1,0:T(1,128)}', space=vmem, size = 0x12000, scoped, tag = 'internal scratch']
  %s0 = inlined_call_operand.hbm [shape: f32[8,32], index: 0, kind: input, shape index: {}]
  %s1 = inlined_call_operand.hbm [shape: f32[32,128], index: 1, kind: input, shape index: {}]
  %s2 = inlined_call_operand.vmem [shape: f32[1,128], index: 2, kind: input, shape index: {}]
  %s3 = inlined_call_operand.hbm [shape: f32[8,128], index: 3, kind: input, shape index: {}]
  %s4 = inlined_call_operand.hbm [shape: f32[128,128], index: 4, kind: output, shape index: {0}]
  %s5 = inlined_call_operand.hbm [shape: f32[128,128], index: 5, kind: output, shape index: {1}]
  %s6 = inlined_call_operand.hbm [shape: f32[1,128], index: 6, kind: output, shape index: {2}]
  %s7 = inlined_call_operand.hbm [shape: f32[1,128], index: 7, kind: output, shape index: {3}]
  %8 = xla_tuple %s4, %s5, %s6, %s7
  %s9 = sld [smem:[#allocation0]]
  $region66: #{tpu_custom_call.1} parent=0
    _
  %s11 = ssub.s32 1, %s9
  %s12 = scalar_select 0, %s11, %s9
  $region1: #{tpu_custom_call.1} parent=0
    #allocation2 [shape = 'u8[4096]{0}', space=vmem, size = 0x1000, scoped, tag = 'input window, operand 0, single buffered']
    #allocation3 [shape = 's32[1]{0}', space=sflag, size = 0x4, scoped, tag = 'scoped memory for tpu_custom_call.1']
    #allocation4 [shape = 's32[1]{0}', space=sflag, size = 0x4, scoped, tag = 'scoped memory for tpu_custom_call.1']
    #allocation5 [shape = 'u8[16384]{0}', space=vmem, size = 0x4000, scoped, tag = 'input window, operand 1, single buffered']
    #allocation6 [shape = 's32[1]{0}', space=sflag, size = 0x4, scoped, tag = 'scoped memory for tpu_custom_call.1']
    #allocation7 [shape = 'u8[4096]{0}', space=vmem, size = 0x1000, scoped, tag = 'input window, operand 3, single buffered']
    #allocation8 [shape = 'u8[65536]{0}', space=vmem, size = 0x10000, scoped, tag = 'output window, operand 0, single buffered']
    #allocation9 [shape = 'u8[65536]{0}', space=vmem, size = 0x10000, scoped, tag = 'output window, operand 1, single buffered']
    #allocation10 [shape = 's32[1]{0}', space=sflag, size = 0x4, scoped, tag = 'scoped memory for tpu_custom_call.1']
    #allocation11 [shape = 'u8[512]{0}', space=vmem, size = 0x400, scoped, tag = 'output window, operand 2, single buffered']
    #allocation12 [shape = 'u8[512]{0}', space=vmem, size = 0x400, scoped, tag = 'output window, operand 3, single buffered']
    #allocation13 [shape = 's32[1]{0}', space=sflag, size = 0x4, scoped, tag = 'scoped memory for tpu_custom_call.1']
    %13 = vsyncpa [#allocation3], 0
    %14 = vsyncpa [#allocation6], 0
    %15 = vsyncpa [#allocation4], 0
    %16 = vsyncpa [#allocation10], 0
    %17 = vsyncpa [#allocation13], 0
    // Predicated region
    $region2: #{tpu_custom_call.1} parent=1 // pred_check
      _
    $region3: #{tpu_custom_call.1} parent=1 // pred_check_branch
      %19 = sbr.rel (0) target = $region5
    $region4: #{tpu_custom_call.1} parent=1 // pred_region
      %s21 = ssub.s32 128, 128
      %22 = vsyncadd [#allocation3], %s21
      %s24 = sshll.u32 [#allocation2], 4
      %s25 = int_to_ptr.vmem [resolvable:$true] %s24
      %27 = dma.hbm_to_vmem [thread:$0]  %s0, 128, %s25, [#allocation3]
    $region5: #{tpu_custom_call.1} parent=1 // pred_fallthru
      _
    // Predicated region
    $region6: #{tpu_custom_call.1} parent=1 // pred_check
      _
    $region7: #{tpu_custom_call.1} parent=1 // pred_check_branch
      %29 = sbr.rel (0) target = $region9
    $region8: #{tpu_custom_call.1} parent=1 // pred_region
      %s31 = ssub.s32 512, 512
      %32 = vsyncadd [#allocation6], %s31
      %s33 = sshll.u32 [#allocation5], 4
      %s34 = int_to_ptr.vmem [resolvable:$true] %s33
      %39 = dma.hbm_to_vmem [thread:$0]  %s1, 512, %s34, [#allocation6], 128, 128, 8
    $region9: #{tpu_custom_call.1} parent=1 // pred_fallthru
      _
    // Predicated region
    $region10: #{tpu_custom_call.1} parent=1 // pred_check
      _
    $region11: #{tpu_custom_call.1} parent=1 // pred_check_branch
      %41 = sbr.rel (0) target = $region13
    $region12: #{tpu_custom_call.1} parent=1 // pred_region
      _
    $region13: #{tpu_custom_call.1} parent=1 // pred_fallthru
      _
    // Predicated region
    $region14: #{tpu_custom_call.1} parent=1 // pred_check
      _
    $region15: #{tpu_custom_call.1} parent=1 // pred_check_branch
      %43 = sbr.rel (0) target = $region17
    $region16: #{tpu_custom_call.1} parent=1 // pred_region
      %s45 = ssub.s32 128, 128
      %46 = vsyncadd [#allocation6], %s45
      %s48 = sshll.u32 [#allocation7], 4
      %s49 = int_to_ptr.vmem [resolvable:$true] %s48
      %51 = dma.hbm_to_vmem [thread:$0]  %s3, 128, %s49, [#allocation6]
    $region17: #{tpu_custom_call.1} parent=1 // pred_fallthru
      _
    // Predicated region
    $region18: #{tpu_custom_call.1} parent=1 // pred_check
      _
    $region19: #{tpu_custom_call.1} parent=1 // pred_check_branch
      %53 = sbr.rel (0) target = $region21
    $region20: #{tpu_custom_call.1} parent=1 // pred_region
      %54 = dma.done [#allocation3], 128
    $region21: #{tpu_custom_call.1} parent=1 // pred_fallthru
      _
    // Predicated region
    $region22: #{tpu_custom_call.1} parent=1 // pred_check
      _
    $region23: #{tpu_custom_call.1} parent=1 // pred_check_branch
      %56 = sbr.rel (0) target = $region25
    $region24: #{tpu_custom_call.1} parent=1 // pred_region
      %57 = dma.done [#allocation6], 512
    $region25: #{tpu_custom_call.1} parent=1 // pred_fallthru
      _
    // Predicated region
    $region26: #{tpu_custom_call.1} parent=1 // pred_check
      _
    $region27: #{tpu_custom_call.1} parent=1 // pred_check_branch
      %59 = sbr.rel (0) target = $region29
    $region28: #{tpu_custom_call.1} parent=1 // pred_region
      %60 = dma.done [#allocation6], 128
    $region29: #{tpu_custom_call.1} parent=1 // pred_fallthru
      _
    %p61 = scmp.eq.s32.totalorder 0, 0
    // Predicated region
    $region30: #{tpu_custom_call.1} parent=1 // pred_check
      %p62 = pneg %p61
    $region31: #{tpu_custom_call.1} parent=1 // pred_check_branch
      %64 = sbr.rel (%p62) target = $region33
    $region32: #{tpu_custom_call.1} parent=1 // pred_region
      %65 = vst [vmem:[#allocation8] sm:$0xff] 0.0
      %66 = vst [vmem:[#allocation8 + $0x8] sm:$0xff] 0.0
      %67 = vst [vmem:[#allocation8 + $0x10] sm:$0xff] 0.0
      %68 = vst [vmem:[#allocation8 + $0x18] sm:$0xff] 0.0
      %69 = vst [vmem:[#allocation8 + $0x20] sm:$0xff] 0.0
      %70 = vst [vmem:[#allocation8 + $0x28] sm:$0xff] 0.0
      %71 = vst [vmem:[#allocation8 + $0x30] sm:$0xff] 0.0
      %72 = vst [vmem:[#allocation8 + $0x38] sm:$0xff] 0.0
      %73 = vst [vmem:[#allocation8 + $0x40] sm:$0xff] 0.0
      %74 = vst [vmem:[#allocation8 + $0x48] sm:$0xff] 0.0
      %75 = vst [vmem:[#allocation8 + $0x50] sm:$0xff] 0.0
      %76 = vst [vmem:[#allocation8 + $0x58] sm:$0xff] 0.0
      %77 = vst [vmem:[#allocation8 + $0x60] sm:$0xff] 0.0
      %78 = vst [vmem:[#allocation8 + $0x68] sm:$0xff] 0.0
      %79 = vst [vmem:[#allocation8 + $0x70] sm:$0xff] 0.0
      %80 = vst [vmem:[#allocation8 + $0x78] sm:$0xff] 0.0
      %81 = vst [vmem:[#allocation9] sm:$0xff] 0.0
      %82 = vst [vmem:[#allocation9 + $0x8] sm:$0xff] 0.0
      %83 = vst [vmem:[#allocation9 + $0x10] sm:$0xff] 0.0
      %84 = vst [vmem:[#allocation9 + $0x18] sm:$0xff] 0.0
      %85 = vst [vmem:[#allocation9 + $0x20] sm:$0xff] 0.0
      %86 = vst [vmem:[#allocation9 + $0x28] sm:$0xff] 0.0
      %87 = vst [vmem:[#allocation9 + $0x30] sm:$0xff] 0.0
      %88 = vst [vmem:[#allocation9 + $0x38] sm:$0xff] 0.0
      %89 = vst [vmem:[#allocation9 + $0x40] sm:$0xff] 0.0
      %90 = vst [vmem:[#allocation9 + $0x48] sm:$0xff] 0.0
      %91 = vst [vmem:[#allocation9 + $0x50] sm:$0xff] 0.0
      %92 = vst [vmem:[#allocation9 + $0x58] sm:$0xff] 0.0
      %93 = vst [vmem:[#allocation9 + $0x60] sm:$0xff] 0.0
      %94 = vst [vmem:[#allocation9 + $0x68] sm:$0xff] 0.0
      %95 = vst [vmem:[#allocation9 + $0x70] sm:$0xff] 0.0
      %96 = vst [vmem:[#allocation9 + $0x78] sm:$0xff] 0.0
      %97 = vst [vmem:[#allocation11] sm:$0x1] 0.0
      %98 = vst [vmem:[#allocation12] sm:$0x1] 0.0
    $region33: #{tpu_custom_call.1} parent=1 // pred_fallthru
      _
    %v99 = vld [vmem:[#allocation2] sm:$0xff]
    %v100 = vld [vmem:[#allocation5] sm:$0xff]
    %v101 = vld [vmem:[#allocation5 + $0x8] sm:$0xff]
    %v102 = vld [vmem:[#allocation5 + $0x10] sm:$0xff]
    %v103 = vld [vmem:[#allocation5 + $0x18] sm:$0xff]
    %v104 = vld [vmem:[%s2] sm:$0x1]
    %v106 = vlaneseq
    %v107 = vshrl.u32 %v106, 7
    %v108 = vsub.s32 0, %v107
    %v109 = vrot.slane %v104, %v108
    %vm111 = vcmask 261120
    %v113 = vsel %vm111, %v99, 0
    %115 = vmatprep.subr.mxu0 0.0
    %116 = vmatpush1.msra.mxu0 0.0
    %117 = vmatprep.subr.mxu0 0.0
    %118 = vmatpush1.msra.mxu0 0.0
    %119 = vmatprep.subr.mxu0 0.0
    %120 = vmatpush1.msra.mxu0 0.0
    %121 = vmatprep.subr.mxu0 0.0
    %122 = vmatpush1.msra.mxu0 0.0
    %123 = vmatprep.subr.mxu0 0.0
    %124 = vmatpush1.msra.mxu0 0.0
    %125 = vmatprep.subr.mxu0 0.0
    %126 = vmatpush1.msra.mxu0 0.0
    %127 = vmatprep.subr.mxu0 0.0
    %128 = vmatpush1.msra.mxu0 0.0
    %129 = vmatprep.subr.mxu0 0.0
    %130 = vmatpush1.msra.mxu0 0.0
    %131 = vmatprep.subr.mxu0 0.0
    %132 = vmatpush1.msra.mxu0 0.0
    %133 = vmatprep.subr.mxu0 0.0
    %134 = vmatpush1.msra.mxu0 0.0
    %135 = vmatprep.subr.mxu0 0.0
    %136 = vmatpush1.msra.mxu0 0.0
    %137 = vmatprep.subr.mxu0 0.0
    %138 = vmatpush1.msra.mxu0 0.0
    %139 = vmatprep.subr.mxu0 0.0
    %140 = vmatpush1.msra.mxu0 %v103
    %141 = vmatprep.subr.mxu0 0.0
    %142 = vmatpush1.msra.mxu0 %v102
    %143 = vmatprep.subr.mxu0 0.0
    %144 = vmatpush1.msra.mxu0 %v101
    %145 = vmatprep.subr.mxu0 0.0
    %146 = vmatpush1.msra.mxu0 %v100
    %147 = vmatprep.subr.mxu0 0.0
    %148 = vmatpush2.msra.mxu0 0.0
    %149 = vmatprep.subr.mxu0 0.0
    %150 = vmatpush2.msra.mxu0 0.0
    %151 = vmatprep.subr.mxu0 0.0
    %152 = vmatpush2.msra.mxu0 0.0
    %153 = vmatprep.subr.mxu0 0.0
    %154 = vmatpush2.msra.mxu0 0.0
    %155 = vmatprep.subr.mxu0 0.0
    %156 = vmatpush2.msra.mxu0 0.0
    %157 = vmatprep.subr.mxu0 0.0
    %158 = vmatpush2.msra.mxu0 0.0
    %159 = vmatprep.subr.mxu0 0.0
    %160 = vmatpush2.msra.mxu0 0.0
    %161 = vmatprep.subr.mxu0 0.0
    %162 = vmatpush2.msra.mxu0 0.0
    %163 = vmatprep.subr.mxu0 0.0
    %164 = vmatpush2.msra.mxu0 0.0
    %165 = vmatprep.subr.mxu0 0.0
    %166 = vmatpush2.msra.mxu0 0.0
    %167 = vmatprep.subr.mxu0 0.0
    %168 = vmatpush2.msra.mxu0 0.0
    %169 = vmatprep.subr.mxu0 0.0
    %170 = vmatpush2.msra.mxu0 0.0
    %171 = vmatprep.subr.mxu0 0.0
    %172 = vmatpush2.msra.mxu0 0.0
    %173 = vmatprep.subr.mxu0 0.0
    %174 = vmatpush2.msra.mxu0 0.0
    %175 = vmatprep.subr.mxu0 0.0
    %176 = vmatpush2.msra.mxu0 0.0
    %177 = vmatprep.subr.mxu0 0.0
    %178 = vmatpush2.msra.mxu0 0.0
    %179 = vmatprep.mubr.f32.mxu0 0.0
    %180 = vmatmul.mubr.f32.gmra.mxu0 %v113
    %v181 = vpop.f32.mrf.mxu0
    %v182 = vadd.f32 %v109, %v181
    %v183 = vpop.f32.mrf.mxu0
    %184 = vdwg.mxu0
    %v185 = vand.u32 2147483647, %v182
    %vm186 = vcmp.le.f32.partialorder %v185, 0.7853982
    %vm187 = vcmp.lt.s32.totalorder %v182, 0
    %v188 = vand.u32 %v182, 2139095040
    %v189 = vshrl.u32 %v188, 23
    %v190 = vsub.s32 %v189, 127
    %v191 = vand.u32 2147483647, %v182
    %v192 = vand.u32 %v191, 8388607
    %v193 = vor.u32 %v192, 8388608
    %v194 = vsub.s32 0, %v193
    %v195 = vadd.s32 %v190, 1
    %vm196 = vcmp.gt.s32.totalorder %v195, 0
    %v197 = vsel %vm196, %v195, 0
    %v198 = vshrl.u32 %v197, 5
    %v199 = vand.u32 %v197, 31
    %v200 = vsub.s32 32, %v199
    %v201 = vshrl.u32 683565275, %v200
    %v202 = vshll.u32 683565275, %v199
    %v203 = vshrl.u32 2475754826, %v200
    %v204 = vor.u32 %v202, %v203
    %v205 = vshll.u32 2475754826, %v199
    %v206 = vshrl.u32 2131351028, %v200
    %v207 = vor.u32 %v205, %v206
    %v208 = vshll.u32 2131351028, %v199
    %v209 = vshrl.u32 2102212464, %v200
    %v210 = vor.u32 %v208, %v209
    %v211 = vshll.u32 2102212464, %v199
    %v212 = vshrl.u32 920167782, %v200
    %v213 = vor.u32 %v211, %v212
    %v214 = vshll.u32 920167782, %v199
    %v215 = vshrl.u32 1326507024, %v200
    %v216 = vor.u32 %v214, %v215
    %vm217 = vcmp.lt.s32.totalorder %v198, 1
    %vm218 = vcmp.lt.s32.totalorder %v198, 2
    %vm219 = vcmp.lt.s32.totalorder %v198, 3
    %vm220 = vcmp.lt.s32.totalorder %v198, 4
    %v221 = vsel %vm217, %v201, %v204
    %v222 = vsel %vm220, %v210, 2102212464
    %v223 = vsel %vm219, %v207, %v222
    %v224 = vsel %vm218, %v221, %v223
    %v225 = vsel %vm217, %v204, %v207
    %v226 = vsel %vm220, %v213, 920167782
    %v227 = vsel %vm219, %v210, %v226
    %v228 = vsel %vm218, %v225, %v227
    %v229 = vsel %vm217, %v207, %v210
    %v230 = vsel %vm220, %v216, 1326507024
    %v231 = vsel %vm219, %v213, %v230
    %v232 = vsel %vm218, %v229, %v231
    %v233 = vshll.u32 %v193, 8
    %v234 = vmul.u32.u64.compose %v233, %v232
    %v235 = vextract.low.u32 %v234
    %v236 = vextract.high.u32 %v234
    %v237 = vmul.u32.u64.compose %v233, %v228
    %v238 = vextract.low.u32 %v237
    %v239 = vextract.high.u32 %v237
    %v240 = vmul.u32 %v233, %v224
    %v241 = vadd.s32 %v236, %v238
    %vm242 = vc.u32 %v236, %v238
    %v243 = vadd.s32 %v239, 1
    %v244 = vsel %vm242, %v243, %v239
    %v245 = vadd.s32 %v240, %v244
    %v246 = vadd.s32 %v245, 536870912
    %v247 = vshrl.u32 %v246, 30
    %v248 = vshll.u32 %v247, 30
    %v249 = vsub.s32 %v245, %v248
    %vm250 = vcmp.lt.s32.totalorder %v249, 0
    %v251 = vsub.s32 0, %v249
    %v252 = vsel %vm250, %v251, %v249
    %v253 = vclz %v252
    %v254 = vsub.s32 %v253, 2
    %vm255 = vcmp.gt.s32.totalorder 0, %v254
    %v256 = vsel %vm255, 0, %v254
    %v257 = vsub.s32 32, %v256
    %v258 = vshll.u32 %v249, %v256
    %v259 = vshrl.u32 %v241, %v257
    %v260 = vor.u32 %v258, %v259
    %v261 = vsub.s32 4294967266, %v256
    %v262 = vadd.s32 %v261, 127
    %v263 = vshll.u32 %v262, 23
    %v264 = vor.u32 4788187, %v263
    %v265 = vand.u32 2147483647, %v264
    %v267 = vcvt.s32.f32 %v260
    %v268 = vmul.f32 %v267, %v265
    %v269 = vxor.u32 %v268, 2147483648
    %v270 = vsel %vm187, %v269, %v268
    %v271 = vsub.s32 4, %v247
    %v272 = vsel %vm187, %v271, %v247
    %v273 = vsel %vm186, %v182, %v270
    %v274 = vsel %vm186, 0, %v272
    %v275 = vcosq.f32.pop %v273
    %v276 = vsinq.f32.pop %v273
    %vm277 = vweird.f32 %v182
    %v278 = vand.u32 %v274, 3
    %vm279 = vcmp.lt.s32.totalorder %v278, 2
    %vm280 = vcmp.eq.s32.totalorder %v278, 0
    %v281 = vxor.u32 %v276, 2147483648
    %v282 = vsel %vm280, %v275, %v281
    %vm283 = vcmp.eq.s32.totalorder %v278, 2
    %v284 = vxor.u32 %v275, 2147483648
    %v285 = vsel %vm283, %v284, %v276
    %v286 = vsel %vm279, %v282, %v285
    %v287 = vsel %vm277, nan, %v286
    %v288 = vmul.f32 %v287, 0.17677669
    %v289 = vld [vmem:[#allocation7] sm:$0xff]
    %v290 = vld [vmem:[#allocation8] sm:$0xff]
    %v291 = vld [vmem:[#allocation8 + $0x8] sm:$0xff]
    %v292 = vld [vmem:[#allocation8 + $0x10] sm:$0xff]
    %v293 = vld [vmem:[#allocation8 + $0x18] sm:$0xff]
    %v294 = vld [vmem:[#allocation8 + $0x20] sm:$0xff]
    %v295 = vld [vmem:[#allocation8 + $0x28] sm:$0xff]
    %v296 = vld [vmem:[#allocation8 + $0x30] sm:$0xff]
    %v297 = vld [vmem:[#allocation8 + $0x38] sm:$0xff]
    %v298 = vld [vmem:[#allocation8 + $0x40] sm:$0xff]
    %v299 = vld [vmem:[#allocation8 + $0x48] sm:$0xff]
    %v300 = vld [vmem:[#allocation8 + $0x50] sm:$0xff]
    %v301 = vld [vmem:[#allocation8 + $0x58] sm:$0xff]
    %v302 = vld [vmem:[#allocation8 + $0x60] sm:$0xff]
    %v303 = vld [vmem:[#allocation8 + $0x68] sm:$0xff]
    %v304 = vld [vmem:[#allocation8 + $0x70] sm:$0xff]
    %v305 = vld [vmem:[#allocation8 + $0x78] sm:$0xff]
    %306 = vxpose.xlu0.b32.start [1/16] %v288, 128
    %307 = vxpose.xlu0.b32.cont [2/16] 0.0, 128
    %308 = vxpose.xlu0.b32.cont [3/16] 0.0, 128
    %309 = vxpose.xlu0.b32.cont [4/16] 0.0, 128
    %310 = vxpose.xlu0.b32.cont [5/16] 0.0, 128
    %311 = vxpose.xlu0.b32.cont [6/16] 0.0, 128
    %312 = vxpose.xlu0.b32.cont [7/16] 0.0, 128
    %313 = vxpose.xlu0.b32.cont [8/16] 0.0, 128
    %314 = vxpose.xlu0.b32.cont [9/16] 0.0, 128
    %315 = vxpose.xlu0.b32.cont [10/16] 0.0, 128
    %316 = vxpose.xlu0.b32.cont [11/16] 0.0, 128
    %317 = vxpose.xlu0.b32.cont [12/16] 0.0, 128
    %318 = vxpose.xlu0.b32.cont [13/16] 0.0, 128
    %319 = vxpose.xlu0.b32.cont [14/16] 0.0, 128
    %320 = vxpose.xlu0.b32.cont [15/16] 0.0, 128
    %321 = vxpose.xlu0.b32.end [16/16] 0.0, 128
    %v322 = vpop.trf.xlu0
    %v323 = vpop.trf.xlu0
    %v324 = vpop.trf.xlu0
    %v325 = vpop.trf.xlu0
    %v326 = vpop.trf.xlu0
    %v327 = vpop.trf.xlu0
    %v328 = vpop.trf.xlu0
    %v329 = vpop.trf.xlu0
    %v330 = vpop.trf.xlu0
    %v331 = vpop.trf.xlu0
    %v332 = vpop.trf.xlu0
    %v333 = vpop.trf.xlu0
    %v334 = vpop.trf.xlu0
    %v335 = vpop.trf.xlu0
    %v336 = vpop.trf.xlu0
    %v337 = vpop.trf.xlu0
    %vm338 = vcmask 64512
    %v340 = vsel %vm338, %v322, 0
    %v343 = vsel %vm338, %v323, 0
    %v346 = vsel %vm338, %v324, 0
    %v349 = vsel %vm338, %v325, 0
    %v352 = vsel %vm338, %v326, 0
    %v355 = vsel %vm338, %v327, 0
    %v358 = vsel %vm338, %v328, 0
    %v361 = vsel %vm338, %v329, 0
    %v364 = vsel %vm338, %v330, 0
    %v367 = vsel %vm338, %v331, 0
    %v370 = vsel %vm338, %v332, 0
    %v373 = vsel %vm338, %v333, 0
    %v376 = vsel %vm338, %v334, 0
    %v379 = vsel %vm338, %v335, 0
    %v382 = vsel %vm338, %v336, 0
    %v385 = vsel %vm338, %v337, 0
    %387 = vmatprep.subr.mxu0 0.0
    %388 = vmatpush1.msra.mxu0 0.0
    %389 = vmatprep.subr.mxu0 0.0
    %390 = vmatpush1.msra.mxu0 0.0
    %391 = vmatprep.subr.mxu0 0.0
    %392 = vmatpush1.msra.mxu0 0.0
    %393 = vmatprep.subr.mxu0 0.0
    %394 = vmatpush1.msra.mxu0 0.0
    %395 = vmatprep.subr.mxu0 0.0
    %396 = vmatpush1.msra.mxu0 0.0
    %397 = vmatprep.subr.mxu0 0.0
    %398 = vmatpush1.msra.mxu0 0.0
    %399 = vmatprep.subr.mxu0 0.0
    %400 = vmatpush1.msra.mxu0 0.0
    %401 = vmatprep.subr.mxu0 0.0
    %402 = vmatpush1.msra.mxu0 0.0
    %403 = vmatprep.subr.mxu0 0.0
    %404 = vmatpush1.msra.mxu0 0.0
    %405 = vmatprep.subr.mxu0 0.0
    %406 = vmatpush1.msra.mxu0 0.0
    %407 = vmatprep.subr.mxu0 0.0
    %408 = vmatpush1.msra.mxu0 0.0
    %409 = vmatprep.subr.mxu0 0.0
    %410 = vmatpush1.msra.mxu0 0.0
    %411 = vmatprep.subr.mxu0 0.0
    %412 = vmatpush1.msra.mxu0 0.0
    %413 = vmatprep.subr.mxu0 0.0
    %414 = vmatpush1.msra.mxu0 0.0
    %415 = vmatprep.subr.mxu0 0.0
    %416 = vmatpush1.msra.mxu0 0.0
    %417 = vmatprep.subr.mxu0 0.0
    %418 = vmatpush1.msra.mxu0 %v288
    %419 = vmatprep.subr.mxu0 0.0
    %420 = vmatpush2.msra.mxu0 0.0
    %421 = vmatprep.subr.mxu0 0.0
    %422 = vmatpush2.msra.mxu0 0.0
    %423 = vmatprep.subr.mxu0 0.0
    %424 = vmatpush2.msra.mxu0 0.0
    %425 = vmatprep.subr.mxu0 0.0
    %426 = vmatpush2.msra.mxu0 0.0
    %427 = vmatprep.subr.mxu0 0.0
    %428 = vmatpush2.msra.mxu0 0.0
    %429 = vmatprep.subr.mxu0 0.0
    %430 = vmatpush2.msra.mxu0 0.0
    %431 = vmatprep.subr.mxu0 0.0
    %432 = vmatpush2.msra.mxu0 0.0
    %433 = vmatprep.subr.mxu0 0.0
    %434 = vmatpush2.msra.mxu0 0.0
    %435 = vmatprep.subr.mxu0 0.0
    %436 = vmatpush2.msra.mxu0 0.0
    %437 = vmatprep.subr.mxu0 0.0
    %438 = vmatpush2.msra.mxu0 0.0
    %439 = vmatprep.subr.mxu0 0.0
    %440 = vmatpush2.msra.mxu0 0.0
    %441 = vmatprep.subr.mxu0 0.0
    %442 = vmatpush2.msra.mxu0 0.0
    %443 = vmatprep.subr.mxu0 0.0
    %444 = vmatpush2.msra.mxu0 0.0
    %445 = vmatprep.subr.mxu0 0.0
    %446 = vmatpush2.msra.mxu0 0.0
    %447 = vmatprep.subr.mxu0 0.0
    %448 = vmatpush2.msra.mxu0 0.0
    %449 = vmatprep.subr.mxu0 0.0
    %450 = vmatpush2.msra.mxu0 0.0
    %451 = vmatprep.mubr.f32.mxu0 0.0
    %452 = vmatmul.mubr.f32.gmra.mxu0 %v340
    %v453 = vpop.f32.mrf.mxu0
    %v454 = vadd.f32 0.0, %v453
    %v455 = vpop.f32.mrf.mxu0
    %456 = vmatprep.mubr.f32.mxu0 0.0
    %457 = vmatmul.mubr.f32.gmra.mxu0 %v343
    %v458 = vpop.f32.mrf.mxu0
    %v459 = vadd.f32 0.0, %v458
    %v460 = vpop.f32.mrf.mxu0
    %461 = vmatprep.mubr.f32.mxu0 0.0
    %462 = vmatmul.mubr.f32.gmra.mxu0 %v346
    %v463 = vpop.f32.mrf.mxu0
    %v464 = vadd.f32 0.0, %v463
    %v465 = vpop.f32.mrf.mxu0
    %466 = vmatprep.mubr.f32.mxu0 0.0
    %467 = vmatmul.mubr.f32.gmra.mxu0 %v349
    %v468 = vpop.f32.mrf.mxu0
    %v469 = vadd.f32 0.0, %v468
    %v470 = vpop.f32.mrf.mxu0
    %471 = vmatprep.mubr.f32.mxu0 0.0
    %472 = vmatmul.mubr.f32.gmra.mxu0 %v352
    %v473 = vpop.f32.mrf.mxu0
    %v474 = vadd.f32 0.0, %v473
    %v475 = vpop.f32.mrf.mxu0
    %476 = vmatprep.mubr.f32.mxu0 0.0
    %477 = vmatmul.mubr.f32.gmra.mxu0 %v355
    %v478 = vpop.f32.mrf.mxu0
    %v479 = vadd.f32 0.0, %v478
    %v480 = vpop.f32.mrf.mxu0
    %481 = vmatprep.mubr.f32.mxu0 0.0
    %482 = vmatmul.mubr.f32.gmra.mxu0 %v358
    %v483 = vpop.f32.mrf.mxu0
    %v484 = vadd.f32 0.0, %v483
    %v485 = vpop.f32.mrf.mxu0
    %486 = vmatprep.mubr.f32.mxu0 0.0
    %487 = vmatmul.mubr.f32.gmra.mxu0 %v361
    %v488 = vpop.f32.mrf.mxu0
    %v489 = vadd.f32 0.0, %v488
    %v490 = vpop.f32.mrf.mxu0
    %491 = vmatprep.mubr.f32.mxu0 0.0
    %492 = vmatmul.mubr.f32.gmra.mxu0 %v364
    %v493 = vpop.f32.mrf.mxu0
    %v494 = vadd.f32 0.0, %v493
    %v495 = vpop.f32.mrf.mxu0
    %496 = vmatprep.mubr.f32.mxu0 0.0
    %497 = vmatmul.mubr.f32.gmra.mxu0 %v367
    %v498 = vpop.f32.mrf.mxu0
    %v499 = vadd.f32 0.0, %v498
    %v500 = vpop.f32.mrf.mxu0
    %501 = vmatprep.mubr.f32.mxu0 0.0
    %502 = vmatmul.mubr.f32.gmra.mxu0 %v370
    %v503 = vpop.f32.mrf.mxu0
    %v504 = vadd.f32 0.0, %v503
    %v505 = vpop.f32.mrf.mxu0
    %506 = vmatprep.mubr.f32.mxu0 0.0
    %507 = vmatmul.mubr.f32.gmra.mxu0 %v373
    %v508 = vpop.f32.mrf.mxu0
    %v509 = vadd.f32 0.0, %v508
    %v510 = vpop.f32.mrf.mxu0
    %511 = vmatprep.mubr.f32.mxu0 0.0
    %512 = vmatmul.mubr.f32.gmra.mxu0 %v376
    %v513 = vpop.f32.mrf.mxu0
    %v514 = vadd.f32 0.0, %v513
    %v515 = vpop.f32.mrf.mxu0
    %516 = vmatprep.mubr.f32.mxu0 0.0
    %517 = vmatmul.mubr.f32.gmra.mxu0 %v379
    %v518 = vpop.f32.mrf.mxu0
    %v519 = vadd.f32 0.0, %v518
    %v520 = vpop.f32.mrf.mxu0
    %521 = vmatprep.mubr.f32.mxu0 0.0
    %522 = vmatmul.mubr.f32.gmra.mxu0 %v382
    %v523 = vpop.f32.mrf.mxu0
    %v524 = vadd.f32 0.0, %v523
    %v525 = vpop.f32.mrf.mxu0
    %526 = vmatprep.mubr.f32.mxu0 0.0
    %527 = vmatmul.mubr.f32.gmra.mxu0 %v385
    %v528 = vpop.f32.mrf.mxu0
    %v529 = vadd.f32 0.0, %v528
    %v530 = vpop.f32.mrf.mxu0
    %531 = vdwg.mxu0
    %v532 = vadd.f32 %v290, %v454
    %v533 = vadd.f32 %v291, %v459
    %v534 = vadd.f32 %v292, %v464
    %v535 = vadd.f32 %v293, %v469
    %v536 = vadd.f32 %v294, %v474
    %v537 = vadd.f32 %v295, %v479
    %v538 = vadd.f32 %v296, %v484
    %v539 = vadd.f32 %v297, %v489
    %v540 = vadd.f32 %v298, %v494
    %v541 = vadd.f32 %v299, %v499
    %v542 = vadd.f32 %v300, %v504
    %v543 = vadd.f32 %v301, %v509
    %v544 = vadd.f32 %v302, %v514
    %v545 = vadd.f32 %v303, %v519
    %v546 = vadd.f32 %v304, %v524
    %v547 = vadd.f32 %v305, %v529
    %548 = vst [vmem:[#allocation8] sm:$0xff] %v532
    %549 = vst [vmem:[#allocation8 + $0x8] sm:$0xff] %v533
    %550 = vst [vmem:[#allocation8 + $0x10] sm:$0xff] %v534
    %551 = vst [vmem:[#allocation8 + $0x18] sm:$0xff] %v535
    %552 = vst [vmem:[#allocation8 + $0x20] sm:$0xff] %v536
    %553 = vst [vmem:[#allocation8 + $0x28] sm:$0xff] %v537
    %554 = vst [vmem:[#allocation8 + $0x30] sm:$0xff] %v538
    %555 = vst [vmem:[#allocation8 + $0x38] sm:$0xff] %v539
    %556 = vst [vmem:[#allocation8 + $0x40] sm:$0xff] %v540
    %557 = vst [vmem:[#allocation8 + $0x48] sm:$0xff] %v541
    %558 = vst [vmem:[#allocation8 + $0x50] sm:$0xff] %v542
    %559 = vst [vmem:[#allocation8 + $0x58] sm:$0xff] %v543
    %560 = vst [vmem:[#allocation8 + $0x60] sm:$0xff] %v544
    %561 = vst [vmem:[#allocation8 + $0x68] sm:$0xff] %v545
    %562 = vst [vmem:[#allocation8 + $0x70] sm:$0xff] %v546
    %563 = vst [vmem:[#allocation8 + $0x78] sm:$0xff] %v547
    %v564 = vld [vmem:[#allocation9] sm:$0xff]
    %v565 = vld [vmem:[#allocation9 + $0x8] sm:$0xff]
    %v566 = vld [vmem:[#allocation9 + $0x10] sm:$0xff]
    %v567 = vld [vmem:[#allocation9 + $0x18] sm:$0xff]
    %v568 = vld [vmem:[#allocation9 + $0x20] sm:$0xff]
    %v569 = vld [vmem:[#allocation9 + $0x28] sm:$0xff]
    %v570 = vld [vmem:[#allocation9 + $0x30] sm:$0xff]
    %v571 = vld [vmem:[#allocation9 + $0x38] sm:$0xff]
    %v572 = vld [vmem:[#allocation9 + $0x40] sm:$0xff]
    %v573 = vld [vmem:[#allocation9 + $0x48] sm:$0xff]
    %v574 = vld [vmem:[#allocation9 + $0x50] sm:$0xff]
    %v575 = vld [vmem:[#allocation9 + $0x58] sm:$0xff]
    %v576 = vld [vmem:[#allocation9 + $0x60] sm:$0xff]
    %v577 = vld [vmem:[#allocation9 + $0x68] sm:$0xff]
    %v578 = vld [vmem:[#allocation9 + $0x70] sm:$0xff]
    %v579 = vld [vmem:[#allocation9 + $0x78] sm:$0xff]
    %580 = vmatprep.subr.mxu0 0.0
    %581 = vmatpush1.msra.mxu0 0.0
    %582 = vmatprep.subr.mxu0 0.0
    %583 = vmatpush1.msra.mxu0 0.0
    %584 = vmatprep.subr.mxu0 0.0
    %585 = vmatpush1.msra.mxu0 0.0
    %586 = vmatprep.subr.mxu0 0.0
    %587 = vmatpush1.msra.mxu0 0.0
    %588 = vmatprep.subr.mxu0 0.0
    %589 = vmatpush1.msra.mxu0 0.0
    %590 = vmatprep.subr.mxu0 0.0
    %591 = vmatpush1.msra.mxu0 0.0
    %592 = vmatprep.subr.mxu0 0.0
    %593 = vmatpush1.msra.mxu0 0.0
    %594 = vmatprep.subr.mxu0 0.0
    %595 = vmatpush1.msra.mxu0 0.0
    %596 = vmatprep.subr.mxu0 0.0
    %597 = vmatpush1.msra.mxu0 0.0
    %598 = vmatprep.subr.mxu0 0.0
    %599 = vmatpush1.msra.mxu0 0.0
    %600 = vmatprep.subr.mxu0 0.0
    %601 = vmatpush1.msra.mxu0 0.0
    %602 = vmatprep.subr.mxu0 0.0
    %603 = vmatpush1.msra.mxu0 0.0
    %604 = vmatprep.subr.mxu0 0.0
    %605 = vmatpush1.msra.mxu0 0.0
    %606 = vmatprep.subr.mxu0 0.0
    %607 = vmatpush1.msra.mxu0 0.0
    %608 = vmatprep.subr.mxu0 0.0
    %609 = vmatpush1.msra.mxu0 0.0
    %610 = vmatprep.subr.mxu0 0.0
    %611 = vmatpush1.msra.mxu0 %v289
    %612 = vmatprep.subr.mxu0 0.0
    %613 = vmatpush2.msra.mxu0 0.0
    %614 = vmatprep.subr.mxu0 0.0
    %615 = vmatpush2.msra.mxu0 0.0
    %616 = vmatprep.subr.mxu0 0.0
    %617 = vmatpush2.msra.mxu0 0.0
    %618 = vmatprep.subr.mxu0 0.0
    %619 = vmatpush2.msra.mxu0 0.0
    %620 = vmatprep.subr.mxu0 0.0
    %621 = vmatpush2.msra.mxu0 0.0
    %622 = vmatprep.subr.mxu0 0.0
    %623 = vmatpush2.msra.mxu0 0.0
    %624 = vmatprep.subr.mxu0 0.0
    %625 = vmatpush2.msra.mxu0 0.0
    %626 = vmatprep.subr.mxu0 0.0
    %627 = vmatpush2.msra.mxu0 0.0
    %628 = vmatprep.subr.mxu0 0.0
    %629 = vmatpush2.msra.mxu0 0.0
    %630 = vmatprep.subr.mxu0 0.0
    %631 = vmatpush2.msra.mxu0 0.0
    %632 = vmatprep.subr.mxu0 0.0
    %633 = vmatpush2.msra.mxu0 0.0
    %634 = vmatprep.subr.mxu0 0.0
    %635 = vmatpush2.msra.mxu0 0.0
    %636 = vmatprep.subr.mxu0 0.0
    %637 = vmatpush2.msra.mxu0 0.0
    %638 = vmatprep.subr.mxu0 0.0
    %639 = vmatpush2.msra.mxu0 0.0
    %640 = vmatprep.subr.mxu0 0.0
    %641 = vmatpush2.msra.mxu0 0.0
    %642 = vmatprep.subr.mxu0 0.0
    %643 = vmatpush2.msra.mxu0 0.0
    %644 = vmatprep.mubr.f32.mxu0 0.0
    %645 = vmatmul.mubr.f32.gmra.mxu0 %v340
    %v646 = vpop.f32.mrf.mxu0
    %v647 = vadd.f32 0.0, %v646
    %v648 = vpop.f32.mrf.mxu0
    %649 = vmatprep.mubr.f32.mxu0 0.0
    %650 = vmatmul.mubr.f32.gmra.mxu0 %v343
    %v651 = vpop.f32.mrf.mxu0
    %v652 = vadd.f32 0.0, %v651
    %v653 = vpop.f32.mrf.mxu0
    %654 = vmatprep.mubr.f32.mxu0 0.0
    %655 = vmatmul.mubr.f32.gmra.mxu0 %v346
    %v656 = vpop.f32.mrf.mxu0
    %v657 = vadd.f32 0.0, %v656
    %v658 = vpop.f32.mrf.mxu0
    %659 = vmatprep.mubr.f32.mxu0 0.0
    %660 = vmatmul.mubr.f32.gmra.mxu0 %v349
    %v661 = vpop.f32.mrf.mxu0
    %v662 = vadd.f32 0.0, %v661
    %v663 = vpop.f32.mrf.mxu0
    %664 = vmatprep.mubr.f32.mxu0 0.0
    %665 = vmatmul.mubr.f32.gmra.mxu0 %v352
    %v666 = vpop.f32.mrf.mxu0
    %v667 = vadd.f32 0.0, %v666
    %v668 = vpop.f32.mrf.mxu0
    %669 = vmatprep.mubr.f32.mxu0 0.0
    %670 = vmatmul.mubr.f32.gmra.mxu0 %v355
    %v671 = vpop.f32.mrf.mxu0
    %v672 = vadd.f32 0.0, %v671
    %v673 = vpop.f32.mrf.mxu0
    %674 = vmatprep.mubr.f32.mxu0 0.0
    %675 = vmatmul.mubr.f32.gmra.mxu0 %v358
    %v676 = vpop.f32.mrf.mxu0
    %v677 = vadd.f32 0.0, %v676
    %v678 = vpop.f32.mrf.mxu0
    %679 = vmatprep.mubr.f32.mxu0 0.0
    %680 = vmatmul.mubr.f32.gmra.mxu0 %v361
    %v681 = vpop.f32.mrf.mxu0
    %v682 = vadd.f32 0.0, %v681
    %v683 = vpop.f32.mrf.mxu0
    %684 = vmatprep.mubr.f32.mxu0 0.0
    %685 = vmatmul.mubr.f32.gmra.mxu0 %v364
    %v686 = vpop.f32.mrf.mxu0
    %v687 = vadd.f32 0.0, %v686
    %v688 = vpop.f32.mrf.mxu0
    %689 = vmatprep.mubr.f32.mxu0 0.0
    %690 = vmatmul.mubr.f32.gmra.mxu0 %v367
    %v691 = vpop.f32.mrf.mxu0
    %v692 = vadd.f32 0.0, %v691
    %v693 = vpop.f32.mrf.mxu0
    %694 = vmatprep.mubr.f32.mxu0 0.0
    %695 = vmatmul.mubr.f32.gmra.mxu0 %v370
    %v696 = vpop.f32.mrf.mxu0
    %v697 = vadd.f32 0.0, %v696
    %v698 = vpop.f32.mrf.mxu0
    %699 = vmatprep.mubr.f32.mxu0 0.0
    %700 = vmatmul.mubr.f32.gmra.mxu0 %v373
    %v701 = vpop.f32.mrf.mxu0
    %v702 = vadd.f32 0.0, %v701
    %v703 = vpop.f32.mrf.mxu0
    %704 = vmatprep.mubr.f32.mxu0 0.0
    %705 = vmatmul.mubr.f32.gmra.mxu0 %v376
    %v706 = vpop.f32.mrf.mxu0
    %v707 = vadd.f32 0.0, %v706
    %v708 = vpop.f32.mrf.mxu0
    %709 = vmatprep.mubr.f32.mxu0 0.0
    %710 = vmatmul.mubr.f32.gmra.mxu0 %v379
    %v711 = vpop.f32.mrf.mxu0
    %v712 = vadd.f32 0.0, %v711
    %v713 = vpop.f32.mrf.mxu0
    %714 = vmatprep.mubr.f32.mxu0 0.0
    %715 = vmatmul.mubr.f32.gmra.mxu0 %v382
    %v716 = vpop.f32.mrf.mxu0
    %v717 = vadd.f32 0.0, %v716
    %v718 = vpop.f32.mrf.mxu0
    %719 = vmatprep.mubr.f32.mxu0 0.0
    %720 = vmatmul.mubr.f32.gmra.mxu0 %v385
    %v721 = vpop.f32.mrf.mxu0
    %v722 = vadd.f32 0.0, %v721
    %v723 = vpop.f32.mrf.mxu0
    %724 = vdwg.mxu0
    %v725 = vadd.f32 %v564, %v647
    %v726 = vadd.f32 %v565, %v652
    %v727 = vadd.f32 %v566, %v657
    %v728 = vadd.f32 %v567, %v662
    %v729 = vadd.f32 %v568, %v667
    %v730 = vadd.f32 %v569, %v672
    %v731 = vadd.f32 %v570, %v677
    %v732 = vadd.f32 %v571, %v682
    %v733 = vadd.f32 %v572, %v687
    %v734 = vadd.f32 %v573, %v692
    %v735 = vadd.f32 %v574, %v697
    %v736 = vadd.f32 %v575, %v702
    %v737 = vadd.f32 %v576, %v707
    %v738 = vadd.f32 %v577, %v712
    %v739 = vadd.f32 %v578, %v717
    %v740 = vadd.f32 %v579, %v722
    %741 = vst [vmem:[#allocation9] sm:$0xff] %v725
    %742 = vst [vmem:[#allocation9 + $0x8] sm:$0xff] %v726
    %743 = vst [vmem:[#allocation9 + $0x10] sm:$0xff] %v727
    %744 = vst [vmem:[#allocation9 + $0x18] sm:$0xff] %v728
    %745 = vst [vmem:[#allocation9 + $0x20] sm:$0xff] %v729
    %746 = vst [vmem:[#allocation9 + $0x28] sm:$0xff] %v730
    %747 = vst [vmem:[#allocation9 + $0x30] sm:$0xff] %v731
    %748 = vst [vmem:[#allocation9 + $0x38] sm:$0xff] %v732
    %749 = vst [vmem:[#allocation9 + $0x40] sm:$0xff] %v733
    %750 = vst [vmem:[#allocation9 + $0x48] sm:$0xff] %v734
    %751 = vst [vmem:[#allocation9 + $0x50] sm:$0xff] %v735
    %752 = vst [vmem:[#allocation9 + $0x58] sm:$0xff] %v736
    %753 = vst [vmem:[#allocation9 + $0x60] sm:$0xff] %v737
    %754 = vst [vmem:[#allocation9 + $0x68] sm:$0xff] %v738
    %755 = vst [vmem:[#allocation9 + $0x70] sm:$0xff] %v739
    %756 = vst [vmem:[#allocation9 + $0x78] sm:$0xff] %v740
    %v757 = vld [vmem:[#allocation11] sm:$0x1]
    %v758 = vrot.slane %v288, 4
    %v759 = vadd.f32 %v288, %v758
    %v760 = vrot.slane %v759, 2
    %v761 = vadd.f32 %v759, %v760
    %v762 = vrot.slane %v761, 1
    %v763 = vadd.f32 %v761, %v762
    %v764 = vadd.f32 %v757, %v763
    %765 = vst [vmem:[#allocation11] sm:$0x1] %v764
    %v766 = vld [vmem:[#allocation12] sm:$0x1]
    %v767 = vrot.slane %v289, 4
    %v768 = vadd.f32 %v289, %v767
    %v769 = vrot.slane %v768, 2
    %v770 = vadd.f32 %v768, %v769
    %v771 = vrot.slane %v770, 1
    %v772 = vadd.f32 %v770, %v771
    %v773 = vadd.f32 %v766, %v772
    %774 = vst [vmem:[#allocation12] sm:$0x1] %v773
    // Predicated region
    $region34: #{tpu_custom_call.1} parent=1 // pred_check
      _
    $region35: #{tpu_custom_call.1} parent=1 // pred_check_branch
      %776 = sbr.rel (0) target = $region37
    $region36: #{tpu_custom_call.1} parent=1 // pred_region
      %s778 = ssub.s32 2048, 2048
      %779 = vsyncadd [#allocation4], %s778
      %s780 = sshll.u32 [#allocation8], 4
      %s781 = int_to_ptr.vmem [resolvable:$true] %s780
      %786 = dma.vmem_to_hbm [thread:$0]  %s781, 2048, %s4, [#allocation4], 128, 128, 8
    $region37: #{tpu_custom_call.1} parent=1 // pred_fallthru
      _
    // Predicated region
    $region38: #{tpu_custom_call.1} parent=1 // pred_check
      _
    $region39: #{tpu_custom_call.1} parent=1 // pred_check_branch
      %788 = sbr.rel (0) target = $region41
    $region40: #{tpu_custom_call.1} parent=1 // pred_region
      %s790 = ssub.s32 2048, 2048
      %791 = vsyncadd [#allocation10], %s790
      %s792 = sshll.u32 [#allocation9], 4
      %s793 = int_to_ptr.vmem [resolvable:$true] %s792
      %798 = dma.vmem_to_hbm [thread:$0]  %s793, 2048, %s5, [#allocation10], 128, 128, 8
    $region41: #{tpu_custom_call.1} parent=1 // pred_fallthru
      _
    // Predicated region
    $region42: #{tpu_custom_call.1} parent=1 // pred_check
      _
    $region43: #{tpu_custom_call.1} parent=1 // pred_check_branch
      %800 = sbr.rel (0) target = $region45
    $region44: #{tpu_custom_call.1} parent=1 // pred_region
      %s802 = ssub.s32 16, 16
      %803 = vsyncadd [#allocation10], %s802
      %s805 = sshll.u32 [#allocation11], 4
      %s806 = int_to_ptr.vmem [resolvable:$true] %s805
      %808 = dma.vmem_to_hbm [thread:$0]  %s806, 16, %s6, [#allocation10]
    $region45: #{tpu_custom_call.1} parent=1 // pred_fallthru
      _
    // Predicated region
    $region46: #{tpu_custom_call.1} parent=1 // pred_check
      _
    $region47: #{tpu_custom_call.1} parent=1 // pred_check_branch
      %810 = sbr.rel (0) target = $region49
    $region48: #{tpu_custom_call.1} parent=1 // pred_region
      %s812 = ssub.s32 16, 16
      %813 = vsyncadd [#allocation13], %s812
      %s815 = sshll.u32 [#allocation12], 4
      %s816 = int_to_ptr.vmem [resolvable:$true] %s815
      %818 = dma.vmem_to_hbm [thread:$0]  %s816, 16, %s7, [#allocation13]
    $region49: #{tpu_custom_call.1} parent=1 // pred_fallthru
      _
    // Predicated region
    $region50: #{tpu_custom_call.1} parent=1 // pred_check
      _
    $region51: #{tpu_custom_call.1} parent=1 // pred_check_branch
      %820 = sbr.rel (0) target = $region53
    $region52: #{tpu_custom_call.1} parent=1 // pred_region
      %821 = dma.done [#allocation4], 2048
    $region53: #{tpu_custom_call.1} parent=1 // pred_fallthru
      _
    // Predicated region
    $region54: #{tpu_custom_call.1} parent=1 // pred_check
      _
    $region55: #{tpu_custom_call.1} parent=1 // pred_check_branch
      %823 = sbr.rel (0) target = $region57
    $region56: #{tpu_custom_call.1} parent=1 // pred_region
      %824 = dma.done [#allocation10], 2048
    $region57: #{tpu_custom_call.1} parent=1 // pred_fallthru
      _
    // Predicated region
    $region58: #{tpu_custom_call.1} parent=1 // pred_check
      _
    $region59: #{tpu_custom_call.1} parent=1 // pred_check_branch
      %826 = sbr.rel (0) target = $region61
    $region60: #{tpu_custom_call.1} parent=1 // pred_region
      %827 = dma.done [#allocation10], 16
    $region61: #{tpu_custom_call.1} parent=1 // pred_fallthru
      _
    // Predicated region
    $region62: #{tpu_custom_call.1} parent=1 // pred_check
      _
    $region63: #{tpu_custom_call.1} parent=1 // pred_check_branch
      %829 = sbr.rel (0) target = $region65
    $region64: #{tpu_custom_call.1} parent=1 // pred_region
      %830 = dma.done [#allocation13], 16
    $region65: #{tpu_custom_call.1} parent=1 // pred_fallthru
      _
    %831 = vsyncpa [#allocation3], 1
    %832 = vsyncpa [#allocation6], 1
    %833 = vsyncpa [#allocation4], 1
    %834 = vsyncpa [#allocation10], 1
    %835 = vsyncpa [#allocation13], 1

</llo_original>
